<compile_context>
chip_gen: v6e
topology: v6e:2x2x1
jax: 0.10.0
libtpu: 0.0.40
codegen_flags: <defaults>
</compile_context>

<pallas_src>
import functools

import jax
import jax.numpy as jnp
from jax import lax
from jax.experimental import pallas as pl
from jax.experimental.pallas import tpu as pltpu


# ----------------------------------------------------------------------------
# helpers
# ----------------------------------------------------------------------------
def _round_up(x: int, m: int) -> int:
    return ((x + m - 1) // m) * m


def _vmem_budget_bytes() -> int:
    """Generation-aware VMEM budget: ~100 MiB on 128-MiB chips, ~48 MiB on 64-MiB (v7x)."""
    try:
        cap = int(pltpu.get_tpu_info().vmem_capacity_bytes)
    except Exception:  # pragma: no cover - query unavailable / non-TPU tracing
        cap = 64 * 1024 * 1024
    if cap >= 128 * 1024 * 1024:
        return 100 * 1024 * 1024
    return 48 * 1024 * 1024


def _pick_tiles(N: int, L: int, H: int, V: int, budget: int):
    """Choose (tn, tv, lc) that fit the VMEM budget with double-buffered windows."""
    tn = min(32, _round_up(N, 8))
    tv = min(1024, _round_up(V, 128))
    lc = min(64, _round_up(L, 8))

    def usage(tn_, tv_, lc_):
        Lp = _round_up(L, lc_)
        hid = 2 * tn_ * Lp * H * 2            # bf16 hidden tile, double-buffered
        msk = 2 * tn_ * Lp * 128 * 2          # bf16 mask tile (lane-padded to 128)
        wt = 2 * H * tv_ * 2                  # bf16 W tile
        bs = 2 * 8 * tv_ * 4                  # f32 bias tile (sublane-padded)
        out = 2 * tn_ * tv_ * 4               # f32 output tile
        acc = tn_ * tv_ * 4                   # running-max carry
        tmp = 2 * tn_ * lc_ * tv_ * 4         # chunk logits intermediate + compiler slack
        return hid + msk + wt + bs + out + acc + tmp

    while usage(tn, tv, lc) > budget and tn > 8:
        tn = max(8, _round_up(tn // 2, 8))
    while usage(tn, tv, lc) > budget and tv > 128:
        tv = max(128, _round_up(tv // 2, 128))
    while usage(tn, tv, lc) > budget and lc > 8:
        lc = max(8, _round_up(lc // 2, 8))
    return tn, tv, lc


# ----------------------------------------------------------------------------
# Kernel 1: fused vocab projection + SPLADE pooling (query/pos/neg stacked on N).
#   sparse[n, v] = log1p( max_l relu(hidden[n,l,:] @ W[:,v] + b[v]) * mask[n,l] )
# (identical to max_l log1p(relu(logits))*mask since log1p is monotone, log1p(0)=0,
#  and all masked values are >= 0, so a 0-initialized running max is exact.)
# ----------------------------------------------------------------------------
def _encode_kernel(hidden_ref, mask_ref, w_ref, b_ref, out_ref, *, lc, n_chunks):
    tn = hidden_ref.shape[0]
    H = hidden_ref.shape[2]
    tv = w_ref.shape[1]

    w = w_ref[...]                                   # bf16 [H, tv], loaded once
    bias = b_ref[...]                                # f32  [1, tv]

    def body(c, running_max):
        start = pl.multiple_of(c * lc, lc)           # sublane-aligned chunk start
        h = hidden_ref[:, pl.ds(start, lc), :].reshape(tn * lc, H)      # bf16 [tn*lc, H]
        m = mask_ref[:, pl.ds(start, lc), :].astype(jnp.float32)        # f32 [tn, lc, 1]
        logits = jnp.dot(h, w, preferred_element_type=jnp.float32)      # MXU, f32 accum
        logits = (logits + bias).reshape(tn, lc, tv)                    # [tn, lc, tv]
        t = jnp.maximum(logits, 0.0) * m                                # relu + pad mask
        return jnp.maximum(running_max, jnp.max(t, axis=1))             # fold into running max

    init = jnp.zeros((tn, tv), jnp.float32)
    running = lax.fori_loop(0, n_chunks, body, init, unroll=(n_chunks <= 8))
    out_ref[...] = jnp.log1p(running)                # log1p hoisted after the max


def splade_encode(hidden, attention_mask, w_vocab, b_vocab, *, tn=None, tv=None, lc=None):
    """hidden: [N, L, H] f32/bf16, attention_mask: [N, L] int -> sparse reps [N, V] f32."""
    N, L, H = hidden.shape
    V = w_vocab.shape[1]

    budget = _vmem_budget_bytes()
    a_tn, a_tv, a_lc = _pick_tiles(N, L, H, V, budget)
    tn = a_tn if tn is None else _round_up(min(tn, _round_up(N, 8)), 8)
    tv = a_tv if tv is None else _round_up(min(tv, _round_up(V, 128)), 128)
    lc = a_lc if lc is None else _round_up(min(lc, _round_up(L, 8)), 8)

    Np = _round_up(N, tn)
    # megacore (v7x): if the N axis collapses to one block, split the vocab sweep so
    # both TensorCores get work.
    if Np // tn == 1 and _round_up(V, tv) // tv < 2 and V > 128:
        tv = max(128, _round_up(pl.cdiv(V, 2), 128))
    Vp = _round_up(V, tv)
    Lp = _round_up(L, lc)
    n_chunks = Lp // lc

    # pad: extra N rows / L positions carry mask == 0 (-> zero contribution); extra
    # vocab columns are zero weight/bias (-> zero reps) and are sliced off below.
    if (Np, Lp) != (N, L):
        hidden = jnp.pad(hidden, ((0, Np - N), (0, Lp - L), (0, 0)))
        attention_mask = jnp.pad(attention_mask, ((0, Np - N), (0, Lp - L)))
    if Vp != V:
        w_vocab = jnp.pad(w_vocab, ((0, 0), (0, Vp - V)))
        b_vocab = jnp.pad(b_vocab, (0, Vp - V))

    hidden_bf16 = hidden.astype(jnp.bfloat16)
    w_bf16 = w_vocab.astype(jnp.bfloat16)
    bias2d = b_vocab.reshape(1, Vp).astype(jnp.float32)
    mask_bf16 = attention_mask.astype(jnp.bfloat16)[:, :, None]          # [Np, Lp, 1]

    kernel = functools.partial(_encode_kernel, lc=lc, n_chunks=n_chunks)

    out = pl.pallas_call(
        kernel,
        out_shape=jax.ShapeDtypeStruct((Np, Vp), jnp.float32),
        grid_spec=pltpu.PrefetchScalarGridSpec(
            num_scalar_prefetch=0,
            # V innermost: hidden/mask tiles keep the same block index across the whole
            # vocab sweep, so they are not re-DMA'd per step.
            grid=(Np // tn, Vp // tv),
            in_specs=[
                pl.BlockSpec((tn, Lp, H), lambda n, v: (n, 0, 0)),
                pl.BlockSpec((tn, Lp, 1), lambda n, v: (n, 0, 0)),
                pl.BlockSpec((H, tv), lambda n, v: (0, v)),
                pl.BlockSpec((1, tv), lambda n, v: (0, v)),
            ],
            out_specs=pl.BlockSpec((tn, tv), lambda n, v: (n, v)),
        ),
        compiler_params=pltpu.CompilerParams(
            # both axes independent (seq reduction is intra-tile) -> megacore-friendly
            dimension_semantics=("parallel", "parallel"),
            vmem_limit_bytes=budget,
        ),
    )(hidden_bf16, mask_bf16, w_bf16, bias2d)

    return out[:N, :V]


# ----------------------------------------------------------------------------
# Kernel 2: pairwise dot-product scores + per-row L1 sums, V-tiled with a resident
# lane-dense [B, 128] accumulator (reps >= 0 by construction, so L1 == sum).
#   out[:, 0] = <q, p>,  out[:, 1] = <q, n>,
#   out[:, 2] = sum(q),  out[:, 3] = sum(p),  out[:, 4] = sum(n)
# ----------------------------------------------------------------------------
_SCORE_LANES = 128


def _score_kernel(q_ref, p_ref, n_ref, out_ref):
    v = pl.program_id(0)

    @pl.when(v == 0)
    def _():
        out_ref[...] = jnp.zeros_like(out_ref)

    q = q_ref[...]
    p = p_ref[...]
    n = n_ref[...]
    ps = jnp.sum(q * p, axis=1, keepdims=True)          # [B, 1] partial
    ns = jnp.sum(q * n, axis=1, keepdims=True)
    ql1 = jnp.sum(q, axis=1, keepdims=True)              # no abs: reps >= 0
    pl1 = jnp.sum(p, axis=1, keepdims=True)
    nl1 = jnp.sum(n, axis=1, keepdims=True)

    B = q.shape[0]
    lane = lax.broadcasted_iota(jnp.int32, (B, _SCORE_LANES), 1)
    partial = (jnp.where(lane == 0, ps, 0.0)
               + jnp.where(lane == 1, ns, 0.0)
               + jnp.where(lane == 2, ql1, 0.0)
               + jnp.where(lane == 3, pl1, 0.0)
               + jnp.where(lane == 4, nl1, 0.0))          # one lane-dense accumulate
    out_ref[...] += partial


def score_and_l1(query_reps, pos_reps, neg_reps, *, tv=None):
    """Returns (pos_scores[B], neg_scores[B], q_l1[B], p_l1[B], n_l1[B])."""
    B, V = query_reps.shape
    if tv is None:
        tv = 2048
    tv = _round_up(min(tv, _round_up(V, 128)), 128)
    Vp = _round_up(V, tv)
    if Vp != V:
        pad = ((0, 0), (0, Vp - V))
        query_reps = jnp.pad(query_reps, pad)
        pos_reps = jnp.pad(pos_reps, pad)
        neg_reps = jnp.pad(neg_reps, pad)

    packed = pl.pallas_call(
        _score_kernel,
        out_shape=jax.ShapeDtypeStruct((B, _SCORE_LANES), jnp.float32),
        grid_spec=pltpu.PrefetchScalarGridSpec(
            num_scalar_prefetch=0,
            grid=(Vp // tv,),
            in_specs=[pl.BlockSpec((B, tv), lambda v: (0, v)) for _ in range(3)],
            out_specs=pl.BlockSpec((B, _SCORE_LANES), lambda v: (0, 0)),
        ),
        compiler_params=pltpu.CompilerParams(
            dimension_semantics=("arbitrary",),           # output is a resident accumulator
            vmem_limit_bytes=_vmem_budget_bytes(),
        ),
    )(query_reps, pos_reps, neg_reps)
    return packed[:, 0], packed[:, 1], packed[:, 2], packed[:, 3], packed[:, 4]


# ----------------------------------------------------------------------------
# L1Regularizer warm-up schedule (host-side Python state, matches PyTorch exactly)
# ----------------------------------------------------------------------------
class L1Regularizer:
    def __init__(self, T: int = 5000, alpha: float = 0.01):
        self.T = T
        self.max_alpha = alpha
        self.current_step = 0
        self.current_alpha = 0.0

    def __call__(self, row_l1_sums):
        # row_l1_sums: [B] precomputed sum_j |reps_ij| (from the Pallas score kernel)
        reg = self.current_alpha * jnp.mean(row_l1_sums)
        self.step()
        return reg

    def step(self):
        if self.current_step < self.T:
            self.current_step += 1
            self.current_alpha = (self.current_step / self.T) ** 2 * self.max_alpha


# ----------------------------------------------------------------------------
# SparseBiEncoder (JAX / Pallas version)
# ----------------------------------------------------------------------------
class SparseBiEncoder:
    def __init__(self, vocab_size=256, hidden=32, q_alpha=0.01, d_alpha=0.0001,
                 T=5000, normalize_enc=False, seed=0):
        self.vocab_size = vocab_size
        self.hidden = hidden
        self.normalize_enc = normalize_enc
        self.q_regularizer = L1Regularizer(alpha=q_alpha, T=T)
        self.d_regularizer = L1Regularizer(alpha=d_alpha, T=T)

        # deterministic parameter init (stand-in for AutoModelForMaskedLM weights)
        key = jax.random.PRNGKey(seed)
        k_emb, k_w1, k_b1, k_wv, k_bv = jax.random.split(key, 5)
        s = 0.02
        self.emb = s * jax.random.normal(k_emb, (vocab_size, hidden), jnp.float32)
        self.w1 = s * jax.random.normal(k_w1, (hidden, hidden), jnp.float32)
        self.b1 = s * jax.random.normal(k_b1, (hidden,), jnp.float32)
        self.w_vocab = s * jax.random.normal(k_wv, (hidden, vocab_size), jnp.float32)
        self.b_vocab = s * jax.random.normal(k_bv, (vocab_size,), jnp.float32)

    # ----- tiny MLM backbone stand-in (plain JAX glue) -----
    def _backbone(self, input_ids):
        x = self.emb[input_ids]                                       # [N, L, H]
        return jnp.tanh(x @ self.w1 + self.b1)                        # [N, L, H]

    def encode(self, input_ids, attention_mask, **kwargs):
        hidden = self._backbone(input_ids)
        return splade_encode(hidden, attention_mask, self.w_vocab, self.b_vocab)

    def forward(self, queries, pos_docs, neg_docs):
        B = queries["input_ids"].shape[0]

        # Fuse the three encodes: stack [query; pos; neg] along batch so W_vocab is
        # streamed from HBM a minimal number of times per forward.
        ids = jnp.concatenate([queries["input_ids"],
                               pos_docs["input_ids"],
                               neg_docs["input_ids"]], axis=0)        # [3B, L]
        mask = jnp.concatenate([queries["attention_mask"],
                                pos_docs["attention_mask"],
                                neg_docs["attention_mask"]], axis=0)  # [3B, L]

        hidden = self._backbone(ids)                                  # [3B, L, H]
        reps = splade_encode(hidden, mask, self.w_vocab, self.b_vocab)  # [3B, V]

        query_reps = reps[:B]
        pos_reps = reps[B:2 * B]
        neg_reps = reps[2 * B:]

        pos_scores, neg_scores, q_l1, p_l1, n_l1 = score_and_l1(
            query_reps, pos_reps, neg_reps)                           # each [B]

        query_reg = self.q_regularizer(q_l1)
        pos_reg = self.d_regularizer(p_l1)
        neg_reg = self.d_regularizer(n_l1)

        # CrossEntropyLoss over [pos, neg] with labels == 0
        scores = jnp.stack([pos_scores, neg_scores], axis=1)          # [B, 2]
        ce = jnp.mean(jax.nn.logsumexp(scores, axis=1) - scores[:, 0])

        loss = ce + query_reg + (pos_reg + neg_reg) / 2.0
        return loss, pos_scores, neg_scores


# ----------------------------------------------------------------------------
# main
# ----------------------------------------------------------------------------
if __name__ == "__main__":
    B, L, H, V = 2, 8, 32, 256

    model = SparseBiEncoder(vocab_size=V, hidden=H, seed=0)

    key = jax.random.PRNGKey(0)
    kq, kp, kn = jax.random.split(key, 3)

    def make_batch(k, n_pad):
        ids = jax.random.randint(k, (B, L), 0, V, dtype=jnp.int32)
        mask = jnp.ones((B, L), jnp.int32)
        if n_pad > 0:
            mask = mask.at[:, L - n_pad:].set(0)                      # simulate padding
        return {"input_ids": ids, "attention_mask": mask}

    queries = make_batch(kq, n_pad=3)
    pos_docs = make_batch(kp, n_pad=1)
    neg_docs = make_batch(kn, n_pad=0)

    loss, pos_scores, neg_scores = model.forward(queries, pos_docs, neg_docs)
    jax.block_until_ready((loss, pos_scores, neg_scores))

    assert loss.shape == ()
    assert pos_scores.shape == (B,)
    assert neg_scores.shape == (B,)
    assert bool(jnp.isfinite(loss))
    print("KERNEL_OK")
</pallas_src>

<mosaic_0001>
module attributes {stable_mosaic.version = 11 : i64} {
  func.func @_encode_kernel(%arg0: i32, %arg1: i32, %arg2: memref<8x8x32xbf16, #tpu.memory_space<vmem>>, %arg3: memref<8x8x1xbf16, #tpu.memory_space<vmem>>, %arg4: memref<32x128xbf16, #tpu.memory_space<vmem>>, %arg5: memref<1x128xf32, #tpu.memory_space<vmem>>, %arg6: memref<8x128xf32, #tpu.memory_space<vmem>>) attributes {dimension_semantics = [#tpu.dimension_semantics<parallel>, #tpu.dimension_semantics<parallel>], iteration_bounds = array<i64: 1, 2>, scalar_prefetch = 0 : i64, scratch_operands = 0 : i64, tpu.core_type = #tpu.core_type<tc>, window_params = [{transform_indices = @transform_0, window_bounds = array<i64: 8, 8, 32>}, {transform_indices = @transform_1, window_bounds = array<i64: 8, 8, 1>}, {transform_indices = @transform_2, window_bounds = array<i64: 32, 128>}, {transform_indices = @transform_3, window_bounds = array<i64: 1, 128>}, {transform_indices = @transform_4, window_bounds = array<i64: 8, 128>}]} {
    %c0 = arith.constant 0 : index
    %c0_0 = arith.constant 0 : index
    %0 = vector.load %arg4[%c0, %c0_0] : memref<32x128xbf16, #tpu.memory_space<vmem>>, vector<32x128xbf16>
    %c0_1 = arith.constant 0 : index
    %c0_2 = arith.constant 0 : index
    %1 = vector.load %arg5[%c0_1, %c0_2] : memref<1x128xf32, #tpu.memory_space<vmem>>, vector<1x128xf32>
    %cst = arith.constant 0.000000e+00 : f32
    %2 = vector.broadcast %cst : f32 to vector<8x128xf32>
    %c0_i32 = arith.constant 0 : i32
    %c8_i32 = arith.constant 8 : i32
    %3 = arith.muli %c0_i32, %c8_i32 : i32
    %4 = tpu.assume_multiple %3, 8 : i32
    %c0_3 = arith.constant 0 : index
    %5 = arith.index_cast %4 : i32 to index
    %c0_4 = arith.constant 0 : index
    %6 = vector.load %arg2[%c0_3, %5, %c0_4] : memref<8x8x32xbf16, #tpu.memory_space<vmem>>, vector<8x8x32xbf16>
    %7 = vector.shape_cast %6 : vector<8x8x32xbf16> to vector<64x32xbf16>
    %c0_5 = arith.constant 0 : index
    %8 = arith.index_cast %4 : i32 to index
    %c0_6 = arith.constant 0 : index
    %9 = vector.load %arg3[%c0_5, %8, %c0_6] : memref<8x8x1xbf16, #tpu.memory_space<vmem>>, vector<8x8x1xbf16>
    %10 = arith.extf %9 : vector<8x8x1xbf16> to vector<8x8x1xf32>
    %cst_7 = arith.constant dense<0.000000e+00> : vector<64x128xf32>
    %11 = tpu.matmul %7, %0, %cst_7 {dimension_numbers = #tpu.dot_dimension_numbers<[1], [0], [0], [1], [0, 0, 1, 1], [], []>} : vector<64x32xbf16>, vector<32x128xbf16>, vector<64x128xf32> -> vector<64x128xf32>
    %12 = vector.broadcast %1 : vector<1x128xf32> to vector<64x128xf32>
    %13 = arith.addf %11, %12 : vector<64x128xf32>
    %14 = vector.shape_cast %13 : vector<64x128xf32> to vector<8x8x128xf32>
    %cst_8 = arith.constant 0.000000e+00 : f32
    %15 = vector.broadcast %cst_8 : f32 to vector<8x8x128xf32>
    %16 = arith.maximumf %14, %15 : vector<8x8x128xf32>
    %17 = vector.broadcast %10 : vector<8x8x1xf32> to vector<8x8x128xf32>
    %18 = arith.mulf %16, %17 : vector<8x8x128xf32>
    %cst_9 = arith.constant dense<0xFF800000> : vector<8x128xf32>
    %19 = vector.multi_reduction <maximumf>, %18, %cst_9 [1] : vector<8x8x128xf32> to vector<8x128xf32>
    %20 = arith.maximumf %2, %19 : vector<8x128xf32>
    %c1_i32 = arith.constant 1 : i32
    %21 = math.log1p %20 : vector<8x128xf32>
    %c0_10 = arith.constant 0 : index
    %c0_11 = arith.constant 0 : index
    %22 = vector.load %arg6[%c0_10, %c0_11] : memref<8x128xf32, #tpu.memory_space<vmem>>, vector<8x128xf32>
    tpu.vector_store %arg6[%c0_10, %c0_11], %21 {strides = array<i32>} : memref<8x128xf32, #tpu.memory_space<vmem>>, vector<8x128xf32>,
    return
  }
  func.func @transform_0(%arg0: i32, %arg1: i32) -> (i32, i32, i32) {
    %c0_i32 = arith.constant 0 : i32
    %c0_i32_0 = arith.constant 0 : i32
    %c0_i32_1 = arith.constant 0 : i32
    return %arg0, %c0_i32, %c0_i32_0 : i32, i32, i32
  }
  func.func @transform_1(%arg0: i32, %arg1: i32) -> (i32, i32, i32) {
    %c0_i32 = arith.constant 0 : i32
    %c0_i32_0 = arith.constant 0 : i32
    %c0_i32_1 = arith.constant 0 : i32
    return %arg0, %c0_i32, %c0_i32_0 : i32, i32, i32
  }
  func.func @transform_2(%arg0: i32, %arg1: i32) -> (i32, i32) {
    %c0_i32 = arith.constant 0 : i32
    %c0_i32_0 = arith.constant 0 : i32
    return %c0_i32, %arg1 : i32, i32
  }
  func.func @transform_3(%arg0: i32, %arg1: i32) -> (i32, i32) {
    %c0_i32 = arith.constant 0 : i32
    %c0_i32_0 = arith.constant 0 : i32
    return %c0_i32, %arg1 : i32, i32
  }
  func.func @transform_4(%arg0: i32, %arg1: i32) -> (i32, i32) {
    %c0_i32 = arith.constant 0 : i32
    return %arg0, %arg1 : i32, i32
  }
}

</mosaic_0001>

<llo_original>
// kernel: tpu_custom_call.1
$region0: #{tpu_custom_call.1}
  #allocation0 [shape = 'u32[]', space=smem, size = 0x4, offset = 0x4, fixed_abs, tag = 'smem constant byte address 0x4 - core index']
  #allocation1 [shape = 'u32[144,128]{1,0:T(1,128)}', space=vmem, size = 0x12000, scoped, tag = 'internal scratch']
  %s0 = inlined_call_operand.vmem [shape: bf16[8,8,32], index: 0, kind: input, shape index: {}]
  %s1 = inlined_call_operand.vmem [shape: bf16[8,8,1], index: 1, kind: input, shape index: {}]
  %s2 = inlined_call_operand.hbm [shape: bf16[32,256], index: 2, kind: input, shape index: {}]
  %s3 = inlined_call_operand.vmem [shape: f32[1,256], index: 3, kind: input, shape index: {}]
  %s4 = inlined_call_operand.hbm [shape: f32[8,256], index: 4, kind: output, shape index: {}]
  %s5 = sld [smem:[#allocation0]]
  $region53: #{tpu_custom_call.1} parent=0
    _
  %s7 = ssub.s32 1, %s5
  %s8 = scalar_select 0, %s7, %s5
  $region1: #{tpu_custom_call.1} parent=0
    #allocation2 [shape = 'u8[16384]{0}', space=vmem, size = 0x4000, scoped, tag = 'input window, operand 2']
    #allocation3 [shape = 's32[2]{0}', space=sflag, size = 0x8, scoped, tag = 'scoped memory for tpu_custom_call.1']
    #allocation4 [shape = 's32[2]{0}', space=sflag, size = 0x8, scoped, tag = 'scoped memory for tpu_custom_call.1']
    #allocation5 [shape = 'u8[8192]{0}', space=vmem, size = 0x2000, scoped, tag = 'output window, operand 0']
    %9 = vsyncpa [#allocation3], 0
    %s10 = scalar_lea.sflag [#allocation3], 1
    %11 = vsyncpa %s10, 0
    %12 = vsyncpa [#allocation4], 0
    %s13 = scalar_lea.sflag [#allocation4], 1
    %14 = vsyncpa %s13, 0
    loop: start=0, step=1, limit=4
    $region2: #{tpu_custom_call.1} parent=1 // loop_pre_header
      _
    $region3: #{tpu_custom_call.1} parent=1 // loop_header
      %s16 = sphi 0, %s20
      %p17 = scmp.ge.s32.totalorder %s16, 4
      %s23 = sphi 0, %s35
      %s24 = sphi 0, %s31
      %s25 = sphi 0, %s23
      %s26 = sphi 0, %s24
      %s27 = sphi 0, %s25
      %s28 = sphi 0, %s26
      %s38 = sphi 0, %s40
      %s41 = sphi 0, %s38
      %s42 = sphi 0, %s41
      %s58 = sphi 0, %s42
      %s64 = sphi 0, %s66
      %s67 = sphi 0, %s64
      %s68 = sphi 0, %s67
      %s84 = sphi 0, %s68
      %s90 = sphi 0, %s92
      %s93 = sphi 0, %s90
      %s94 = sphi 0, %s93
      %s110 = sphi 0, %s94
      %s116 = sphi 0, %s118
      %s119 = sphi 0, %s116
      %s120 = sphi 0, %s119
      %s136 = sphi 0, %s120
      %s144 = sphi 0, %s146
      %s147 = sphi 0, %s144
      %s148 = sphi 0, %s147
      %s164 = sphi 0, %s148
    $region4: #{tpu_custom_call.1} parent=1 // loop_header_branch
      %19 = sbr.rel (%p17) target = $region8
    $region5: #{tpu_custom_call.1} parent=1 // loop_body
      %s21 = ssub.s32 %s16, 1
      %s22 = ssub.s32 %s16, 2
      %s29 = sadd.s32 1, %s24
      %p30 = scmp.ge.s32.totalorder %s29, 2
      %s31 = scalar_select %p30, 0, %s29
      %s32 = sadd.s32 1, %s23
      %s33 = scalar_select %p30, %s32, %s23
      %p34 = scmp.ge.s32.totalorder %s33, 1
      %s35 = scalar_select %p34, 0, %s33
      %s36 = ssub.s32 %s23, %s35
      %p37 = scmp.eq.s32.totalorder %s36, 0
      %s39 = sadd.s32 %s38, 1
      %s40 = scalar_select %p37, %s38, %s39
      %p43 = pneg %p37
      %p44 = scmp.eq.s32.totalorder %s16, 1
      %p45 = por %p43, %p44
      %p46 = scmp.ne.s32.totalorder %s38, %s41
      %p47 = scmp.eq.s32.totalorder %s16, 0
      %p48 = por %p46, %p47
      %p49 = scmp.ne.s32.totalorder %s38, %s41
      %p50 = scmp.eq.s32.totalorder %s21, 1
      %p51 = por %p49, %p50
      %p52 = scmp.ne.s32.totalorder %s41, %s42
      %p53 = scmp.eq.s32.totalorder %s21, 0
      %p54 = por %p52, %p53
      %p55 = scmp.ne.s32.totalorder %s41, %s42
      %p56 = scmp.eq.s32.totalorder %s22, 1
      %p57 = por %p55, %p56
      %p59 = scmp.ne.s32.totalorder %s42, %s58
      %p60 = scmp.eq.s32.totalorder %s22, 0
      %p61 = por %p59, %p60
      %s62 = ssub.s32 %s23, %s35
      %p63 = scmp.eq.s32.totalorder %s62, 0
      %s65 = sadd.s32 %s64, 1
      %s66 = scalar_select %p63, %s64, %s65
      %p69 = pneg %p63
      %p70 = scmp.eq.s32.totalorder %s16, 1
      %p71 = por %p69, %p70
      %p72 = scmp.ne.s32.totalorder %s64, %s67
      %p73 = scmp.eq.s32.totalorder %s16, 0
      %p74 = por %p72, %p73
      %p75 = scmp.ne.s32.totalorder %s64, %s67
      %p76 = scmp.eq.s32.totalorder %s21, 1
      %p77 = por %p75, %p76
      %p78 = scmp.ne.s32.totalorder %s67, %s68
      %p79 = scmp.eq.s32.totalorder %s21, 0
      %p80 = por %p78, %p79
      %p81 = scmp.ne.s32.totalorder %s67, %s68
      %p82 = scmp.eq.s32.totalorder %s22, 1
      %p83 = por %p81, %p82
      %p85 = scmp.ne.s32.totalorder %s68, %s84
      %p86 = scmp.eq.s32.totalorder %s22, 0
      %p87 = por %p85, %p86
      %s88 = ssub.s32 %s24, %s31
      %p89 = scmp.eq.s32.totalorder %s88, 0
      %s91 = sadd.s32 %s90, 1
      %s92 = scalar_select %p89, %s90, %s91
      %p95 = pneg %p89
      %p96 = scmp.eq.s32.totalorder %s16, 1
      %p97 = por %p95, %p96
      %p98 = scmp.ne.s32.totalorder %s90, %s93
      %p99 = scmp.eq.s32.totalorder %s16, 0
      %p100 = por %p98, %p99
      %p101 = scmp.ne.s32.totalorder %s90, %s93
      %p102 = scmp.eq.s32.totalorder %s21, 1
      %p103 = por %p101, %p102
      %p104 = scmp.ne.s32.totalorder %s93, %s94
      %p105 = scmp.eq.s32.totalorder %s21, 0
      %p106 = por %p104, %p105
      %p107 = scmp.ne.s32.totalorder %s93, %s94
      %p108 = scmp.eq.s32.totalorder %s22, 1
      %p109 = por %p107, %p108
      %p111 = scmp.ne.s32.totalorder %s94, %s110
      %p112 = scmp.eq.s32.totalorder %s22, 0
      %p113 = por %p111, %p112
      %s114 = ssub.s32 %s24, %s31
      %p115 = scmp.eq.s32.totalorder %s114, 0
      %s117 = sadd.s32 %s116, 1
      %s118 = scalar_select %p115, %s116, %s117
      %p121 = pneg %p115
      %p122 = scmp.eq.s32.totalorder %s16, 1
      %p123 = por %p121, %p122
      %p124 = scmp.ne.s32.totalorder %s116, %s119
      %p125 = scmp.eq.s32.totalorder %s16, 0
      %p126 = por %p124, %p125
      %p127 = scmp.ne.s32.totalorder %s116, %s119
      %p128 = scmp.eq.s32.totalorder %s21, 1
      %p129 = por %p127, %p128
      %p130 = scmp.ne.s32.totalorder %s119, %s120
      %p131 = scmp.eq.s32.totalorder %s21, 0
      %p132 = por %p130, %p131
      %p133 = scmp.ne.s32.totalorder %s119, %s120
      %p134 = scmp.eq.s32.totalorder %s22, 1
      %p135 = por %p133, %p134
      %p137 = scmp.ne.s32.totalorder %s120, %s136
      %p138 = scmp.eq.s32.totalorder %s22, 0
      %p139 = por %p137, %p138
      %s140 = ssub.s32 %s23, %s35
      %s141 = ssub.s32 %s24, %s31
      %s142 = sor.u32 %s140, %s141
      %p143 = scmp.eq.s32.totalorder %s142, 0
      %s145 = sadd.s32 %s144, 1
      %s146 = scalar_select %p143, %s144, %s145
      %p149 = pneg %p143
      %p150 = scmp.eq.s32.totalorder %s16, 1
      %p151 = por %p149, %p150
      %p152 = scmp.ne.s32.totalorder %s144, %s147
      %p153 = scmp.eq.s32.totalorder %s16, 0
      %p154 = por %p152, %p153
      %p155 = scmp.ne.s32.totalorder %s144, %s147
      %p156 = scmp.eq.s32.totalorder %s21, 1
      %p157 = por %p155, %p156
      %p158 = scmp.ne.s32.totalorder %s147, %s148
      %p159 = scmp.eq.s32.totalorder %s21, 0
      %p160 = por %p158, %p159
      %p161 = scmp.ne.s32.totalorder %s147, %s148
      %p162 = scmp.eq.s32.totalorder %s22, 1
      %p163 = por %p161, %p162
      %p165 = scmp.ne.s32.totalorder %s148, %s164
      %p166 = scmp.eq.s32.totalorder %s22, 0
      %p167 = por %p165, %p166
      %p168 = scmp.le.s32.totalorder 1, %s16
      %p169 = scmp.lt.s32.totalorder %s16, 3
      %p170 = pnand %p168, %p169
      %p171 = pneg %p170
      // Predicated region
      $region9: #{tpu_custom_call.1} parent=5 // pred_check
        _
      $region10: #{tpu_custom_call.1} parent=5 // pred_check_branch
        %173 = sbr.rel (%p170) target = $region12
      $region11: #{tpu_custom_call.1} parent=5 // pred_region
        %s174 = ssub.s32 %s16, 1
        // Predicated region
        $region13: #{tpu_custom_call.1} parent=11 // pred_check
          %p175 = pneg %p54
        $region14: #{tpu_custom_call.1} parent=11 // pred_check_branch
          %177 = sbr.rel (%p175) target = $region16
        $region15: #{tpu_custom_call.1} parent=11 // pred_region
          %s178 = smul.u32 8, %s25
          %p179 = scmp.lt.s32.totalorder %s178, 7
          %s180 = scalar_select %p179, %s178, 7
          %s181 = smul.addr %s180, 4
          %s182 = scalar_lea.vmem %s0, %s181
          %s183 = smul.u32 8, %s25
        $region16: #{tpu_custom_call.1} parent=11 // pred_fallthru
          _
        // Predicated region
        $region17: #{tpu_custom_call.1} parent=11 // pred_check
          %p184 = pneg %p80
        $region18: #{tpu_custom_call.1} parent=11 // pred_check_branch
          %186 = sbr.rel (%p184) target = $region20
        $region19: #{tpu_custom_call.1} parent=11 // pred_region
          %s187 = smul.u32 8, %s25
          %p188 = scmp.lt.s32.totalorder %s187, 7
          %s189 = scalar_select %p188, %s187, 7
          %s190 = smul.addr %s189, 4
          %s191 = scalar_lea.vmem %s1, %s190
          %s192 = smul.u32 8, %s25
        $region20: #{tpu_custom_call.1} parent=11 // pred_fallthru
          _
      $region12: #{tpu_custom_call.1} parent=5 // pred_fallthru
        _
      %p193 = scmp.lt.s32.totalorder %s16, 2
      // Predicated region
      $region21: #{tpu_custom_call.1} parent=5 // pred_check
        %p194 = pneg %p193
      $region22: #{tpu_custom_call.1} parent=5 // pred_check_branch
        %196 = sbr.rel (%p194) target = $region24
      $region23: #{tpu_custom_call.1} parent=5 // pred_region
        // Predicated region
        $region25: #{tpu_custom_call.1} parent=23 // pred_check
          %p197 = pneg %p100
        $region26: #{tpu_custom_call.1} parent=23 // pred_check_branch
          %199 = sbr.rel (%p197) target = $region28
        $region27: #{tpu_custom_call.1} parent=23 // pred_region
          %s200 = sand.u32 %s90, 1
          %s201 = scalar_lea.sflag [#allocation3], %s200
          %s202 = sand.u32 %s90, 1
          %s203 = smul.addr %s202, 16
          %s204 = scalar_lea.vmem [#allocation2], %s203
          %s206 = ssub.s32 256, 256
          %207 = vsyncadd %s201, %s206
          %s208 = smul.addr %s24, 64
          %s209 = scalar_lea.hbm %s2, %s208
          %s210 = sshll.u32 %s204, 4
          %s211 = int_to_ptr.vmem [resolvable:$true] %s210
          %216 = dma.hbm_to_vmem [thread:$0]  %s209, 256, %s211, %s201, 128, 64, 4
        $region28: #{tpu_custom_call.1} parent=23 // pred_fallthru
          _
        // Predicated region
        $region29: #{tpu_custom_call.1} parent=23 // pred_check
          %p217 = pneg %p126
        $region30: #{tpu_custom_call.1} parent=23 // pred_check_branch
          %219 = sbr.rel (%p217) target = $region32
        $region31: #{tpu_custom_call.1} parent=23 // pred_region
          %p220 = scmp.lt.s32.totalorder %s24, 1
          %s221 = scalar_select %p220, %s24, 1
          %s222 = scalar_lea.vmem %s3, %s221
        $region32: #{tpu_custom_call.1} parent=23 // pred_fallthru
          _
      $region24: #{tpu_custom_call.1} parent=5 // pred_fallthru
        _
      %p223 = scmp.le.s32.totalorder 1, %s16
      %p224 = scmp.lt.s32.totalorder %s16, 3
      %p225 = pnand %p223, %p224
      %p226 = pneg %p225
      // Predicated region
      $region33: #{tpu_custom_call.1} parent=5 // pred_check
        _
      $region34: #{tpu_custom_call.1} parent=5 // pred_check_branch
        %228 = sbr.rel (%p225) target = $region36
      $region35: #{tpu_custom_call.1} parent=5 // pred_region
        %s229 = ssub.s32 %s16, 1
        %s230 = sand.u32 %s93, 1
        %s231 = scalar_lea.sflag [#allocation3], %s230
        %s232 = sand.u32 %s93, 1
        %s233 = smul.addr %s232, 16
        %s234 = scalar_lea.vmem [#allocation2], %s233
        // Predicated region
        $region37: #{tpu_custom_call.1} parent=35 // pred_check
          %p235 = pneg %p106
        $region38: #{tpu_custom_call.1} parent=35 // pred_check_branch
          %237 = sbr.rel (%p235) target = $region40
        $region39: #{tpu_custom_call.1} parent=35 // pred_region
          %238 = dma.done %s231, 256
        $region40: #{tpu_custom_call.1} parent=35 // pred_fallthru
          _
        %s239 = smul.u32 8, %s25
        %p240 = scmp.lt.s32.totalorder %s239, 7
        %s241 = scalar_select %p240, %s239, 7
        %s242 = smul.addr %s241, 4
        %s243 = scalar_lea.vmem %s0, %s242
        %p244 = pneg %p54
        %p245 = pneg %p51
        %s246 = smul.u32 8, %s25
        %p247 = scmp.lt.s32.totalorder %s246, 7
        %s248 = scalar_select %p247, %s246, 7
        %s249 = smul.addr %s248, 4
        %s250 = scalar_lea.vmem %s1, %s249
        %p251 = pneg %p80
        %p252 = pneg %p77
        %s253 = sand.u32 %s93, 1
        %s254 = scalar_lea.sflag [#allocation3], %s253
        %s255 = sand.u32 %s93, 1
        %s256 = smul.addr %s255, 16
        %s257 = scalar_lea.vmem [#allocation2], %s256
        %p258 = pneg %p106
        %p259 = pneg %p103
        %p260 = scmp.lt.s32.totalorder %s26, 1
        %s261 = scalar_select %p260, %s26, 1
        %s262 = scalar_lea.vmem %s3, %s261
        %p263 = pneg %p132
        %p264 = pneg %p129
        %p265 = pneg %p160
        %p266 = pneg %p157
        %s267 = sand.u32 %s147, 1
        %s268 = scalar_lea.sflag [#allocation4], %s267
        %s269 = sand.u32 %s147, 1
        %s270 = smul.addr %s269, 8
        %s271 = scalar_lea.vmem [#allocation5], %s270
        %s272 = smul.u32 8, %s25
        %p273 = scmp.lt.s32.totalorder %s272, 7
        %s274 = scalar_select %p273, %s272, 7
        %s275 = smul.addr %s274, 4
        %s276 = scalar_lea.vmem %s0, %s275
        %s277 = smul.u32 8, %s25
        %s278 = smul.u32 8, %s25
        %p279 = scmp.lt.s32.totalorder %s278, 7
        %s280 = scalar_select %p279, %s278, 7
        %s281 = smul.addr %s280, 4
        %s282 = scalar_lea.vmem %s1, %s281
        %s283 = smul.u32 8, %s25
        %p284 = scmp.lt.s32.totalorder %s26, 1
        %s285 = scalar_select %p284, %s26, 1
        %s286 = scalar_lea.vmem %s3, %s285
        %v288 = vld [vmem:[%s234] sm:$0xf]
        %v289 = vld [vmem:[%s234 + $0x4] sm:$0xf]
        %v290 = vld [vmem:[%s234 + $0x8] sm:$0xf]
        %v291 = vld [vmem:[%s234 + $0xc] sm:$0xf]
        %v292 = vld [vmem:[%s286] sm:$0x1]
        %v293 = vld [vmem:[%s276] sm:$0xf]
        %v294 = vld [vmem:[%s276 + $0x4] sm:$0xf]
        %v295 = vld [vmem:[%s276 + $0x8] sm:$0xf]
        %v296 = vld [vmem:[%s276 + $0xc] sm:$0xf]
        %v297 = vld [vmem:[%s276 + $0x10] sm:$0xf]
        %v298 = vld [vmem:[%s276 + $0x14] sm:$0xf]
        %v299 = vld [vmem:[%s276 + $0x18] sm:$0xf]
        %v300 = vld [vmem:[%s276 + $0x1c] sm:$0xf]
        %v301 = vld [vmem:[%s282] sm:$0xf]
        %v302 = vld [vmem:[%s282 + $0x4] sm:$0xf]
        %v303 = vld [vmem:[%s282 + $0x8] sm:$0xf]
        %v304 = vld [vmem:[%s282 + $0xc] sm:$0xf]
        %v305 = vld [vmem:[%s282 + $0x10] sm:$0xf]
        %v306 = vld [vmem:[%s282 + $0x14] sm:$0xf]
        %v307 = vld [vmem:[%s282 + $0x18] sm:$0xf]
        %v308 = vld [vmem:[%s282 + $0x1c] sm:$0xf]
        %v309 = vunpack.c.l.bf16 %v301
        %v310 = vunpack.c.l.bf16 %v302
        %v311 = vunpack.c.l.bf16 %v303
        %v312 = vunpack.c.l.bf16 %v304
        %v313 = vunpack.c.l.bf16 %v305
        %v314 = vunpack.c.l.bf16 %v306
        %v315 = vunpack.c.l.bf16 %v307
        %v316 = vunpack.c.l.bf16 %v308
        %v318 = vlaneseq
        %v319 = vshrl.u32 %v318, 7
        %v320 = vsub.s32 0, %v319
        %v321 = vrot.slane %v292, %v320
        %v331 = vunpack.c.l.b16 %v293
        %v332 = vunpack.c.l.b16 %v294
        %v333 = vunpack.c.l.b16 %v295
        %v334 = vunpack.c.l.b16 %v296
        %v335 = vunpack.c.l.b16 %v297
        %v336 = vunpack.c.l.b16 %v298
        %v337 = vunpack.c.l.b16 %v299
        %v338 = vunpack.c.l.b16 %v300
        %v339 = vpack.c.b16 %v332, %v331
        %v340 = vpack.c.b16 %v334, %v333
        %v341 = vpack.c.b16 %v336, %v335
        %v342 = vpack.c.b16 %v338, %v337
        %v347 = vunpack.c.l.b16 %v288
        %v348 = vunpack.c.l.b16 %v289
        %v349 = vunpack.c.l.b16 %v290
        %v350 = vunpack.c.l.b16 %v291
        %v351 = vpack.c.b16 %v348, %v347
        %v352 = vpack.c.b16 %v350, %v349
        %vm355 = vcmask 261120
        %v357 = vsel %vm355, %v339, 0
        %v360 = vsel %vm355, %v340, 0
        %v363 = vsel %vm355, %v341, 0
        %v366 = vsel %vm355, %v342, 0
        %368 = vmatprep.subr.bf16.mxu0 0
        %369 = vmatpush1.bf16.msra.mxu0 0
        %370 = vmatprep.subr.bf16.mxu0 0
        %371 = vmatpush1.bf16.msra.mxu0 0
        %372 = vmatprep.subr.bf16.mxu0 0
        %373 = vmatpush1.bf16.msra.mxu0 0
        %374 = vmatprep.subr.bf16.mxu0 0
        %375 = vmatpush1.bf16.msra.mxu0 0
        %376 = vmatprep.subr.bf16.mxu0 0
        %377 = vmatpush1.bf16.msra.mxu0 0
        %378 = vmatprep.subr.bf16.mxu0 0
        %379 = vmatpush1.bf16.msra.mxu0 0
        %380 = vmatprep.subr.bf16.mxu0 0
        %381 = vmatpush1.bf16.msra.mxu0 %v352
        %382 = vmatprep.subr.bf16.mxu0 0
        %383 = vmatpush1.bf16.msra.mxu0 %v351
        %384 = vmatprep.subr.bf16.mxu0 0
        %385 = vmatpush2.bf16.msra.mxu0 0
        %386 = vmatprep.subr.bf16.mxu0 0
        %387 = vmatpush2.bf16.msra.mxu0 0
        %388 = vmatprep.subr.bf16.mxu0 0
        %389 = vmatpush2.bf16.msra.mxu0 0
        %390 = vmatprep.subr.bf16.mxu0 0
        %391 = vmatpush2.bf16.msra.mxu0 0
        %392 = vmatprep.subr.bf16.mxu0 0
        %393 = vmatpush2.bf16.msra.mxu0 0
        %394 = vmatprep.subr.bf16.mxu0 0
        %395 = vmatpush2.bf16.msra.mxu0 0
        %396 = vmatprep.subr.bf16.mxu0 0
        %397 = vmatpush2.bf16.msra.mxu0 0
        %398 = vmatprep.subr.bf16.mxu0 0
        %399 = vmatpush2.bf16.msra.mxu0 0
        %400 = vmatprep.mubr.bf16.mxu0 0
        %401 = vmatmul.mubr.bf16.gmra.mxu0 %v357
        %v402 = vpop.f32.mrf.mxu0
        %v403 = vadd.f32 %v321, %v402
        %v404 = vpop.f32.mrf.mxu0
        %v405 = vpop.f32.mrf.mxu0
        %v406 = vadd.f32 %v321, %v405
        %v407 = vpop.f32.mrf.mxu0
        %408 = vmatprep.mubr.bf16.mxu0 0
        %409 = vmatmul.mubr.bf16.gmra.mxu0 %v360
        %v410 = vpop.f32.mrf.mxu0
        %v411 = vadd.f32 %v321, %v410
        %v412 = vpop.f32.mrf.mxu0
        %v413 = vpop.f32.mrf.mxu0
        %v414 = vadd.f32 %v321, %v413
        %v415 = vpop.f32.mrf.mxu0
        %416 = vmatprep.mubr.bf16.mxu0 0
        %417 = vmatmul.mubr.bf16.gmra.mxu0 %v363
        %v418 = vpop.f32.mrf.mxu0
        %v419 = vadd.f32 %v321, %v418
        %v420 = vpop.f32.mrf.mxu0
        %v421 = vpop.f32.mrf.mxu0
        %v422 = vadd.f32 %v321, %v421
        %v423 = vpop.f32.mrf.mxu0
        %424 = vmatprep.mubr.bf16.mxu0 0
        %425 = vmatmul.mubr.bf16.gmra.mxu0 %v366
        %v426 = vpop.f32.mrf.mxu0
        %v427 = vadd.f32 %v321, %v426
        %v428 = vpop.f32.mrf.mxu0
        %v429 = vpop.f32.mrf.mxu0
        %v430 = vadd.f32 %v321, %v429
        %v431 = vpop.f32.mrf.mxu0
        %432 = vdwg.mxu0
        %v433 = vmax.f32 %v403, 0.0
        %v434 = vmax.f32 %v406, 0.0
        %v435 = vmax.f32 %v411, 0.0
        %v436 = vmax.f32 %v414, 0.0
        %v437 = vmax.f32 %v419, 0.0
        %v438 = vmax.f32 %v422, 0.0
        %v439 = vmax.f32 %v427, 0.0
        %v440 = vmax.f32 %v430, 0.0
        %442 = vset.pattern.permute.xlu0 0
        %443 = vperm.xlu0 %442, %v309
        %v444 = vpop.permute.xlu0 %443
        %447 = vset.pattern.permute.xlu0 0
        %448 = vperm.xlu0 %447, %v310
        %v449 = vpop.permute.xlu0 %448
        %452 = vset.pattern.permute.xlu0 0
        %453 = vperm.xlu0 %452, %v311
        %v454 = vpop.permute.xlu0 %453
        %457 = vset.pattern.permute.xlu0 0
        %458 = vperm.xlu0 %457, %v312
        %v459 = vpop.permute.xlu0 %458
        %462 = vset.pattern.permute.xlu0 0
        %463 = vperm.xlu0 %462, %v313
        %v464 = vpop.permute.xlu0 %463
        %467 = vset.pattern.permute.xlu0 0
        %468 = vperm.xlu0 %467, %v314
        %v469 = vpop.permute.xlu0 %468
        %472 = vset.pattern.permute.xlu0 0
        %473 = vperm.xlu0 %472, %v315
        %v474 = vpop.permute.xlu0 %473
        %477 = vset.pattern.permute.xlu0 0
        %478 = vperm.xlu0 %477, %v316
        %v479 = vpop.permute.xlu0 %478
        %v481 = vmul.f32 %v433, %v444
        %v482 = vmul.f32 %v434, %v449
        %v483 = vmul.f32 %v435, %v454
        %v484 = vmul.f32 %v436, %v459
        %v485 = vmul.f32 %v437, %v464
        %v486 = vmul.f32 %v438, %v469
        %v487 = vmul.f32 %v439, %v474
        %v488 = vmul.f32 %v440, %v479
        %v489 = vrot.slane %v481, 4
        %v490 = vmax.f32 %v481, %v489
        %v491 = vrot.slane %v490, 2
        %v492 = vmax.f32 %v490, %v491
        %v493 = vrot.slane %v492, 1
        %v494 = vmax.f32 %v492, %v493
        %v495 = vrot.slane %v482, 4
        %v496 = vmax.f32 %v482, %v495
        %v497 = vrot.slane %v496, 2
        %v498 = vmax.f32 %v496, %v497
        %v499 = vrot.slane %v498, 1
        %v500 = vmax.f32 %v498, %v499
        %v501 = vrot.slane %v483, 4
        %v502 = vmax.f32 %v483, %v501
        %v503 = vrot.slane %v502, 2
        %v504 = vmax.f32 %v502, %v503
        %v505 = vrot.slane %v504, 1
        %v506 = vmax.f32 %v504, %v505
        %v507 = vrot.slane %v484, 4
        %v508 = vmax.f32 %v484, %v507
        %v509 = vrot.slane %v508, 2
        %v510 = vmax.f32 %v508, %v509
        %v511 = vrot.slane %v510, 1
        %v512 = vmax.f32 %v510, %v511
        %v513 = vrot.slane %v485, 4
        %v514 = vmax.f32 %v485, %v513
        %v515 = vrot.slane %v514, 2
        %v516 = vmax.f32 %v514, %v515
        %v517 = vrot.slane %v516, 1
        %v518 = vmax.f32 %v516, %v517
        %v519 = vrot.slane %v486, 4
        %v520 = vmax.f32 %v486, %v519
        %v521 = vrot.slane %v520, 2
        %v522 = vmax.f32 %v520, %v521
        %v523 = vrot.slane %v522, 1
        %v524 = vmax.f32 %v522, %v523
        %v525 = vrot.slane %v487, 4
        %v526 = vmax.f32 %v487, %v525
        %v527 = vrot.slane %v526, 2
        %v528 = vmax.f32 %v526, %v527
        %v529 = vrot.slane %v528, 1
        %v530 = vmax.f32 %v528, %v529
        %v531 = vrot.slane %v488, 4
        %v532 = vmax.f32 %v488, %v531
        %v533 = vrot.slane %v532, 2
        %v534 = vmax.f32 %v532, %v533
        %v535 = vrot.slane %v534, 1
        %v536 = vmax.f32 %v534, %v535
        %v537 = vmax.f32 %v494, 0.0
        %v538 = vmax.f32 %v500, 0.0
        %v539 = vmax.f32 %v506, 0.0
        %v540 = vmax.f32 %v512, 0.0
        %v541 = vmax.f32 %v518, 0.0
        %v542 = vmax.f32 %v524, 0.0
        %v543 = vmax.f32 %v530, 0.0
        %v544 = vmax.f32 %v536, 0.0
        %v545 = vadd.f32 %v537, 1.0
        %v546 = vlog2.pop %v545
        %v547 = vmul.f32 %v546, 0.6931472
        %v548 = vmul.f32 -0.5, %v537
        %v549 = vadd.f32 %v548, 1.0
        %v550 = vmul.f32 %v549, %v537
        %v551 = vand.u32 2147483647, %v537
        %vm552 = vcmp.lt.f32.partialorder %v551, 0.0004427343
        %v553 = vsel %vm552, %v550, %v547
        %v554 = vadd.f32 %v538, 1.0
        %v555 = vlog2.pop %v554
        %v556 = vmul.f32 %v555, 0.6931472
        %v557 = vmul.f32 -0.5, %v538
        %v558 = vadd.f32 %v557, 1.0
        %v559 = vmul.f32 %v558, %v538
        %v560 = vand.u32 2147483647, %v538
        %vm561 = vcmp.lt.f32.partialorder %v560, 0.0004427343
        %v562 = vsel %vm561, %v559, %v556
        %v563 = vadd.f32 %v539, 1.0
        %v564 = vlog2.pop %v563
        %v565 = vmul.f32 %v564, 0.6931472
        %v566 = vmul.f32 -0.5, %v539
        %v567 = vadd.f32 %v566, 1.0
        %v568 = vmul.f32 %v567, %v539
        %v569 = vand.u32 2147483647, %v539
        %vm570 = vcmp.lt.f32.partialorder %v569, 0.0004427343
        %v571 = vsel %vm570, %v568, %v565
        %v572 = vadd.f32 %v540, 1.0
        %v573 = vlog2.pop %v572
        %v574 = vmul.f32 %v573, 0.6931472
        %v575 = vmul.f32 -0.5, %v540
        %v576 = vadd.f32 %v575, 1.0
        %v577 = vmul.f32 %v576, %v540
        %v578 = vand.u32 2147483647, %v540
        %vm579 = vcmp.lt.f32.partialorder %v578, 0.0004427343
        %v580 = vsel %vm579, %v577, %v574
        %v581 = vadd.f32 %v541, 1.0
        %v582 = vlog2.pop %v581
        %v583 = vmul.f32 %v582, 0.6931472
        %v584 = vmul.f32 -0.5, %v541
        %v585 = vadd.f32 %v584, 1.0
        %v586 = vmul.f32 %v585, %v541
        %v587 = vand.u32 2147483647, %v541
        %vm588 = vcmp.lt.f32.partialorder %v587, 0.0004427343
        %v589 = vsel %vm588, %v586, %v583
        %v590 = vadd.f32 %v542, 1.0
        %v591 = vlog2.pop %v590
        %v592 = vmul.f32 %v591, 0.6931472
        %v593 = vmul.f32 -0.5, %v542
        %v594 = vadd.f32 %v593, 1.0
        %v595 = vmul.f32 %v594, %v542
        %v596 = vand.u32 2147483647, %v542
        %vm597 = vcmp.lt.f32.partialorder %v596, 0.0004427343
        %v598 = vsel %vm597, %v595, %v592
        %v599 = vadd.f32 %v543, 1.0
        %v600 = vlog2.pop %v599
        %v601 = vmul.f32 %v600, 0.6931472
        %v602 = vmul.f32 -0.5, %v543
        %v603 = vadd.f32 %v602, 1.0
        %v604 = vmul.f32 %v603, %v543
        %v605 = vand.u32 2147483647, %v543
        %vm606 = vcmp.lt.f32.partialorder %v605, 0.0004427343
        %v607 = vsel %vm606, %v604, %v601
        %v608 = vadd.f32 %v544, 1.0
        %v609 = vlog2.pop %v608
        %v610 = vmul.f32 %v609, 0.6931472
        %v611 = vmul.f32 -0.5, %v544
        %v612 = vadd.f32 %v611, 1.0
        %v613 = vmul.f32 %v612, %v544
        %v614 = vand.u32 2147483647, %v544
        %vm615 = vcmp.lt.f32.partialorder %v614, 0.0004427343
        %v616 = vsel %vm615, %v613, %v610
        %vm625 = vcmask 1041409
        %v626 = vsel %vm625, %v562, %v553
        %vm627 = vcmask 1042434
        %v628 = vsel %vm627, %v571, %v626
        %vm629 = vcmask 1043459
        %v630 = vsel %vm629, %v580, %v628
        %vm631 = vcmask 1044484
        %v632 = vsel %vm631, %v589, %v630
        %vm633 = vcmask 1045509
        %v634 = vsel %vm633, %v598, %v632
        %vm635 = vcmask 1046534
        %v636 = vsel %vm635, %v607, %v634
        %vm637 = vcmask 1047559
        %v638 = vsel %vm637, %v616, %v636
        %640 = vst [vmem:[%s271] sm:$0xff] %v638
        %s641 = sand.u32 %s147, 1
        %s642 = scalar_lea.sflag [#allocation4], %s641
        %s643 = sand.u32 %s147, 1
        %s644 = smul.addr %s643, 8
        %s645 = scalar_lea.vmem [#allocation5], %s644
        // Predicated region
        $region41: #{tpu_custom_call.1} parent=35 // pred_check
          %p646 = pneg %p157
        $region42: #{tpu_custom_call.1} parent=35 // pred_check_branch
          %648 = sbr.rel (%p646) target = $region44
        $region43: #{tpu_custom_call.1} parent=35 // pred_region
          %s650 = ssub.s32 128, 128
          %651 = vsyncadd %s642, %s650
          %s652 = smul.addr %s25, 2
          %s653 = sadd.s32 %s26, %s652
          %s654 = smul.addr %s653, 128
          %s655 = scalar_lea.hbm %s4, %s654
          %s657 = sshll.u32 %s645, 4
          %s658 = int_to_ptr.vmem [resolvable:$true] %s657
          %660 = dma.vmem_to_hbm [thread:$0]  %s658, 128, %s655, %s642
        $region44: #{tpu_custom_call.1} parent=35 // pred_fallthru
          _
      $region36: #{tpu_custom_call.1} parent=5 // pred_fallthru
        _
      %p661 = scmp.le.s32.totalorder 2, %s16
      // Predicated region
      $region45: #{tpu_custom_call.1} parent=5 // pred_check
        %p662 = pneg %p661
      $region46: #{tpu_custom_call.1} parent=5 // pred_check_branch
        %664 = sbr.rel (%p662) target = $region48
      $region47: #{tpu_custom_call.1} parent=5 // pred_region
        %s665 = ssub.s32 %s16, 2
        // Predicated region
        $region49: #{tpu_custom_call.1} parent=47 // pred_check
          %p666 = pneg %p163
        $region50: #{tpu_custom_call.1} parent=47 // pred_check_branch
          %668 = sbr.rel (%p666) target = $region52
        $region51: #{tpu_custom_call.1} parent=47 // pred_region
          %s669 = sand.u32 %s148, 1
          %s670 = scalar_lea.sflag [#allocation4], %s669
          %s671 = sand.u32 %s148, 1
          %s672 = smul.addr %s671, 8
          %s673 = scalar_lea.vmem [#allocation5], %s672
          %674 = dma.done %s670, 128
        $region52: #{tpu_custom_call.1} parent=47 // pred_fallthru
          _
      $region48: #{tpu_custom_call.1} parent=5 // pred_fallthru
        _
    $region6: #{tpu_custom_call.1} parent=1 // loop_footer
      %s20 = sadd.s32 1, %s16
    $region7: #{tpu_custom_call.1} parent=1 // loop_footer_branch
      %15 = sbr.rel target = $region3
    $region8: #{tpu_custom_call.1} parent=1 // loop_exit
      _
    %675 = vsyncpa [#allocation3], 1
    %s676 = scalar_lea.sflag [#allocation3], 1
    %677 = vsyncpa %s676, 1
    %678 = vsyncpa [#allocation4], 1
    %s679 = scalar_lea.sflag [#allocation4], 1
    %680 = vsyncpa %s679, 1

</llo_original>
